<compile_context>
chip_gen: v5e
topology: v5e:2x2
jax: 0.10.0
libtpu: 0.0.40
codegen_flags: <defaults>
</compile_context>

<pallas_src>
import jax
import jax.numpy as jnp
from jax import lax
from jax.experimental import pallas as pl
from jax.experimental.pallas import tpu as pltpu

_EPS = 1e-12  # matches torch.nn.functional.normalize default eps


def _round_up(v, m):
    return -(-v // m) * m


def _cosine_linear_kernel(sigma_ref, x_ref, w_ref, inv_x_ref, inv_w_ref,
                          o_ref, acc_ref):
    # sigma_ref: SMEM (1,) f32
    # x_ref: (tm, tk)  w_ref: (tn, tk)  inv_x_ref: (tm, 1)  inv_w_ref: (1, tn)
    # o_ref: (tm, tn)  acc_ref: VMEM (tm, tn) f32
    k = pl.program_id(2)

    @pl.when(k == 0)
    def _():
        acc_ref[...] = jnp.zeros_like(acc_ref)

    # Raw x @ W^T on the MXU (weight kept untransposed), f32 accumulation.
    acc_ref[...] += lax.dot_general(
        x_ref[...], w_ref[...],
        dimension_numbers=(((1,), (1,)), ((), ())),
        preferred_element_type=jnp.float32,
    )

    @pl.when(k == pl.num_programs(2) - 1)
    def _():
        # Fold the L2 normalization and sigma into the f32 accumulator:
        # out = sigma * inv_x * (x @ W^T) * inv_w
        scaled = (sigma_ref[0] * inv_x_ref[...]) * acc_ref[...] * inv_w_ref[...]
        o_ref[...] = scaled.astype(o_ref.dtype)


def _k_tiling(K, tk_max=512):
    """Pick (kp, tk): single full-K step for small K, else tk_max tiles."""
    if K <= 2 * tk_max:
        return K, K
    return _round_up(K, tk_max), tk_max


def _batch_tiling(n):
    mp = _round_up(max(n, 8), 8)
    tm = 256 if mp >= 256 else min(128, mp)
    mp = _round_up(mp, tm)
    return mp, tm


def prepare_weight(weight, matmul_dtype=jnp.bfloat16, tk_max=512):
    """One-time per-parameter prep: pad + cast W, precompute inv row norms.

    Call once and reuse across forwards (avoids re-padding W every call).
    Returns (w_padded, inv_w_padded_row, out_features, tn, tk).
    """
    out_features, K = weight.shape
    tn = 256 if out_features >= 256 else 128
    np_ = _round_up(out_features, tn)
    kp, tk = _k_tiling(K, tk_max)

    w32 = weight.astype(jnp.float32)
    inv_w = lax.rsqrt(jnp.maximum(jnp.sum(w32 * w32, axis=1), _EPS * _EPS))
    inv_w_p = jnp.pad(inv_w, (0, np_ - out_features)).reshape(1, np_)

    w_p = weight
    if (np_, kp) != (out_features, K):
        w_p = jnp.pad(weight, ((0, np_ - out_features), (0, kp - K)))
    w_p = w_p.astype(matmul_dtype)
    return w_p, inv_w_p, out_features, tn, tk


def cosine_linear_forward(x, prepared, sigma=None):
    """x: (batch, in_features); prepared: output of prepare_weight; sigma: scalar or None."""
    w_p, inv_w_p, out_features, tn, tk = prepared
    n, K = x.shape
    np_, kp = w_p.shape
    mp, tm = _batch_tiling(n)

    # Per-row inverse L2 norms of x (tiny fused XLA op, done once per call).
    x32 = x.astype(jnp.float32)
    inv_x = lax.rsqrt(
        jnp.maximum(jnp.sum(x32 * x32, axis=1, keepdims=True), _EPS * _EPS))

    # Pad batch/K with zeros (padded rows get inv_x = 0 -> output 0, sliced off).
    x_p = x
    if (mp, kp) != (n, K):
        x_p = jnp.pad(x, ((0, mp - n), (0, kp - K)))
    x_p = x_p.astype(w_p.dtype)
    inv_x_p = inv_x if mp == n else jnp.pad(inv_x, ((0, mp - n), (0, 0)))

    sigma_arr = jnp.asarray(
        1.0 if sigma is None else sigma, dtype=jnp.float32).reshape(1)

    grid = (mp // tm, np_ // tn, kp // tk)

    itemsize = jnp.dtype(w_p.dtype).itemsize
    cost = pl.CostEstimate(
        flops=2 * mp * np_ * kp,
        transcendentals=0,
        bytes_accessed=(mp * kp * itemsize           # x stream
                        + np_ * kp * itemsize        # W stream
                        + mp * np_ * jnp.dtype(x.dtype).itemsize  # out
                        + (mp + np_) * 4),           # inverse norms
    )

    out_p = pl.pallas_call(
        _cosine_linear_kernel,
        out_shape=jax.ShapeDtypeStruct((mp, np_), x.dtype),
        grid_spec=pltpu.PrefetchScalarGridSpec(
            num_scalar_prefetch=0,
            grid=grid,
            in_specs=[
                pl.BlockSpec(memory_space=pltpu.MemorySpace.SMEM),   # sigma
                pl.BlockSpec((tm, tk), lambda i, j, k: (i, k)),      # x tile
                pl.BlockSpec((tn, tk), lambda i, j, k: (j, k)),      # W tile
                pl.BlockSpec((tm, 1), lambda i, j, k: (i, 0)),       # inv_x
                pl.BlockSpec((1, tn), lambda i, j, k: (0, j)),       # inv_w
            ],
            out_specs=pl.BlockSpec((tm, tn), lambda i, j, k: (i, j)),
            scratch_shapes=[pltpu.VMEM((tm, tn), jnp.float32)],
        ),
        compiler_params=pltpu.CompilerParams(
            dimension_semantics=("parallel", "parallel", "arbitrary"),
            vmem_limit_bytes=32 * 1024 * 1024,
        ),
        cost_estimate=cost,
    )(sigma_arr, x_p, w_p, inv_x_p, inv_w_p)

    return out_p[:n, :out_features]


if __name__ == "__main__":
    # Small shapes implied by the module's forward: 2-D input (batch, in_features).
    batch, in_features, out_features = 2, 256, 10

    key = jax.random.PRNGKey(0)
    kx, kw = jax.random.split(key, 2)

    x = jax.random.normal(kx, (batch, in_features), dtype=jnp.float32)

    # reset_parameters(): W ~ U(-1/sqrt(in_features), 1/sqrt(in_features)), sigma = 1.
    stdv = 1.0 / (in_features ** 0.5)
    weight = jax.random.uniform(
        kw, (out_features, in_features), jnp.float32, -stdv, stdv)
    sigma = jnp.float32(1.0)

    # Plain-JAX reference: sigma * F.linear(normalize(x), normalize(W)).
    def _l2n(a):
        return a / jnp.maximum(jnp.linalg.norm(a, axis=1, keepdims=True), _EPS)

    ref = sigma * (_l2n(x) @ _l2n(weight).T)

    # 1) f32-operand path: tight check against the reference.
    prep_f32 = prepare_weight(weight, matmul_dtype=jnp.float32)
    out_f32 = jax.block_until_ready(cosine_linear_forward(x, prep_f32, sigma))
    assert out_f32.shape == (batch, out_features)
    assert jnp.allclose(out_f32, ref, atol=1e-5, rtol=1e-5)

    # 2) bf16-operand path (perf default on v6e/v7x MXU, f32 accumulation):
    #    error is plain bf16-matmul level since normalization is applied to
    #    the f32 accumulator.
    prep_bf16 = prepare_weight(weight, matmul_dtype=jnp.bfloat16)
    out_bf16 = jax.block_until_ready(cosine_linear_forward(x, prep_bf16, sigma))
    assert out_bf16.shape == (batch, out_features)
    assert jnp.allclose(out_bf16, ref, atol=2e-2, rtol=2e-2)

    print("KERNEL_OK")
</pallas_src>

<mosaic_0001>
module attributes {stable_mosaic.version = 11 : i64} {
  func.func @_cosine_linear_kernel(%arg0: i32, %arg1: i32, %arg2: i32, %arg3: memref<1xf32, #tpu.memory_space<smem>>, %arg4: memref<8x256xf32, #tpu.memory_space<vmem>>, %arg5: memref<128x256xf32, #tpu.memory_space<vmem>>, %arg6: memref<8x1xf32, #tpu.memory_space<vmem>>, %arg7: memref<1x128xf32, #tpu.memory_space<vmem>>, %arg8: memref<8x128xf32, #tpu.memory_space<vmem>>, %arg9: memref<8x128xf32, #tpu.memory_space<vmem>>) attributes {dimension_semantics = [#tpu.dimension_semantics<parallel>, #tpu.dimension_semantics<parallel>, #tpu.dimension_semantics<arbitrary>], iteration_bounds = array<i64: 1, 1, 1>, scalar_prefetch = 0 : i64, scratch_operands = 1 : i64, tpu.core_type = #tpu.core_type<tc>, window_params = [{transform_indices = @transform_0, window_bounds = array<i64: 1>}, {transform_indices = @transform_1, window_bounds = array<i64: 8, 256>}, {transform_indices = @transform_2, window_bounds = array<i64: 128, 256>}, {transform_indices = @transform_3, window_bounds = array<i64: 8, 1>}, {transform_indices = @transform_4, window_bounds = array<i64: 1, 128>}, {transform_indices = @transform_5, window_bounds = array<i64: 8, 128>}]} {
    %c0_i32 = arith.constant 0 : i32
    %0 = arith.cmpi eq, %arg2, %c0_i32 : i32
    %1 = arith.extui %0 : i1 to i32
    %c0_i32_0 = arith.constant 0 : i32
    %2 = arith.cmpi ne, %1, %c0_i32_0 : i32
    scf.if %2 {
      %cst_10 = arith.constant 0.000000e+00 : f32
      %12 = vector.broadcast %cst_10 : f32 to vector<8x128xf32>
      %c0_11 = arith.constant 0 : index
      %c0_12 = arith.constant 0 : index
      %13 = vector.load %arg9[%c0_11, %c0_12] : memref<8x128xf32, #tpu.memory_space<vmem>>, vector<8x128xf32>
      tpu.vector_store %arg9[%c0_11, %c0_12], %12 {strides = array<i32>} : memref<8x128xf32, #tpu.memory_space<vmem>>, vector<8x128xf32>,
    } else {
    }
    %c0 = arith.constant 0 : index
    %c0_1 = arith.constant 0 : index
    %3 = vector.load %arg9[%c0, %c0_1] : memref<8x128xf32, #tpu.memory_space<vmem>>, vector<8x128xf32>
    %c0_2 = arith.constant 0 : index
    %c0_3 = arith.constant 0 : index
    %4 = vector.load %arg4[%c0_2, %c0_3] : memref<8x256xf32, #tpu.memory_space<vmem>>, vector<8x256xf32>
    %c0_4 = arith.constant 0 : index
    %c0_5 = arith.constant 0 : index
    %5 = vector.load %arg5[%c0_4, %c0_5] : memref<128x256xf32, #tpu.memory_space<vmem>>, vector<128x256xf32>
    %cst = arith.constant dense<0.000000e+00> : vector<8x128xf32>
    %6 = tpu.matmul %4, %5, %cst {dimension_numbers = #tpu.dot_dimension_numbers<[1], [1], [0], [0], [0, 0, 1, 0], [], []>} : vector<8x256xf32>, vector<128x256xf32>, vector<8x128xf32> -> vector<8x128xf32>
    %7 = arith.addf %3, %6 : vector<8x128xf32>
    %c0_6 = arith.constant 0 : index
    %c0_7 = arith.constant 0 : index
    %8 = vector.load %arg9[%c0_6, %c0_7] : memref<8x128xf32, #tpu.memory_space<vmem>>, vector<8x128xf32>
    tpu.vector_store %arg9[%c0_6, %c0_7], %7 {strides = array<i32>} : memref<8x128xf32, #tpu.memory_space<vmem>>, vector<8x128xf32>,
    %c0_i32_8 = arith.constant 0 : i32
    %9 = arith.cmpi eq, %arg2, %c0_i32_8 : i32
    %10 = arith.extui %9 : i1 to i32
    %c0_i32_9 = arith.constant 0 : i32
    %11 = arith.cmpi ne, %10, %c0_i32_9 : i32
    scf.if %11 {
      %c0_10 = arith.constant 0 : index
      %12 = memref.load %arg3[%c0_10] : memref<1xf32, #tpu.memory_space<smem>>
      %c0_11 = arith.constant 0 : index
      %c0_12 = arith.constant 0 : index
      %13 = vector.load %arg6[%c0_11, %c0_12] : memref<8x1xf32, #tpu.memory_space<vmem>>, vector<8x1xf32>
      %14 = vector.broadcast %12 : f32 to vector<8x1xf32>
      %15 = arith.mulf %14, %13 : vector<8x1xf32>
      %c0_13 = arith.constant 0 : index
      %c0_14 = arith.constant 0 : index
      %16 = vector.load %arg9[%c0_13, %c0_14] : memref<8x128xf32, #tpu.memory_space<vmem>>, vector<8x128xf32>
      %17 = vector.broadcast %15 : vector<8x1xf32> to vector<8x128xf32>
      %18 = arith.mulf %17, %16 : vector<8x128xf32>
      %c0_15 = arith.constant 0 : index
      %c0_16 = arith.constant 0 : index
      %19 = vector.load %arg7[%c0_15, %c0_16] : memref<1x128xf32, #tpu.memory_space<vmem>>, vector<1x128xf32>
      %20 = vector.broadcast %19 : vector<1x128xf32> to vector<8x128xf32>
      %21 = arith.mulf %18, %20 : vector<8x128xf32>
      %c0_17 = arith.constant 0 : index
      %c0_18 = arith.constant 0 : index
      %22 = vector.load %arg8[%c0_17, %c0_18] : memref<8x128xf32, #tpu.memory_space<vmem>>, vector<8x128xf32>
      tpu.vector_store %arg8[%c0_17, %c0_18], %21 {strides = array<i32>} : memref<8x128xf32, #tpu.memory_space<vmem>>, vector<8x128xf32>,
    } else {
    }
    return
  }
  func.func @transform_0(%arg0: i32, %arg1: i32, %arg2: i32) -> i32 {
    %c0_i32 = arith.constant 0 : i32
    %c0_i32_0 = arith.constant 0 : i32
    return %c0_i32 : i32
  }
  func.func @transform_1(%arg0: i32, %arg1: i32, %arg2: i32) -> (i32, i32) {
    %c0_i32 = arith.constant 0 : i32
    return %arg0, %arg2 : i32, i32
  }
  func.func @transform_2(%arg0: i32, %arg1: i32, %arg2: i32) -> (i32, i32) {
    %c0_i32 = arith.constant 0 : i32
    return %arg1, %arg2 : i32, i32
  }
  func.func @transform_3(%arg0: i32, %arg1: i32, %arg2: i32) -> (i32, i32) {
    %c0_i32 = arith.constant 0 : i32
    %c0_i32_0 = arith.constant 0 : i32
    return %arg0, %c0_i32 : i32, i32
  }
  func.func @transform_4(%arg0: i32, %arg1: i32, %arg2: i32) -> (i32, i32) {
    %c0_i32 = arith.constant 0 : i32
    %c0_i32_0 = arith.constant 0 : i32
    return %c0_i32, %arg1 : i32, i32
  }
  func.func @transform_5(%arg0: i32, %arg1: i32, %arg2: i32) -> (i32, i32) {
    %c0_i32 = arith.constant 0 : i32
    return %arg0, %arg1 : i32, i32
  }
}

</mosaic_0001>

<llo_original>
// kernel: tpu_custom_call.1
$region0: #{tpu_custom_call.1}
  #allocation0 [shape = 'u32[]', space=smem, size = 0x4, offset = 0x4, fixed_abs, tag = 'smem constant byte address 0x4 - core index']
  #allocation1 [shape = 'u32[72,128]{1,0:T(1,128)}', space=vmem, size = 0x9000, scoped, tag = 'internal scratch']
  #allocation2 [shape = 'f32[8,128]{1,0:T(8,128)}', space=vmem, size = 0x1000, scoped, tag = 'scratch operand']
  #allocation3 [shape = 'f32[1]{0:T(128)S(6)}', space=smem, size = 0x200, scoped, tag = 'scoped memory for tpu_custom_call.1']
  %s0 = inlined_call_operand.<no memory space> [shape: f32[1], index: 0, kind: input, shape index: {}]
  %s1 = inlined_call_operand.hbm [shape: f32[8,256], index: 1, kind: input, shape index: {}]
  %s2 = inlined_call_operand.hbm [shape: f32[128,256], index: 2, kind: input, shape index: {}]
  %s3 = inlined_call_operand.vmem [shape: f32[8,1], index: 3, kind: input, shape index: {}]
  %s4 = inlined_call_operand.vmem [shape: f32[1,128], index: 4, kind: input, shape index: {}]
  %s5 = inlined_call_operand.hbm [shape: f32[8,128], index: 5, kind: output, shape index: {}]
  %s6 = sld [smem:[#allocation0]]
  $region46: #{tpu_custom_call.1} parent=0
    _
  %s8 = ssub.s32 1, %s6
  %s9 = scalar_select 0, %s8, %s6
  %10 = sst [smem:[#allocation3]] %s0
  $region1: #{tpu_custom_call.1} parent=0
    #allocation4 [shape = 'u8[8192]{0}', space=vmem, size = 0x2000, scoped, tag = 'input window, operand 1, single buffered']
    #allocation5 [shape = 's32[1]{0}', space=sflag, size = 0x4, scoped, tag = 'scoped memory for tpu_custom_call.1']
    #allocation6 [shape = 's32[1]{0}', space=sflag, size = 0x4, scoped, tag = 'scoped memory for tpu_custom_call.1']
    #allocation7 [shape = 'u8[131072]{0}', space=vmem, size = 0x20000, scoped, tag = 'input window, operand 2, single buffered']
    #allocation8 [shape = 's32[1]{0}', space=sflag, size = 0x4, scoped, tag = 'scoped memory for tpu_custom_call.1']
    #allocation9 [shape = 'u8[4096]{0}', space=vmem, size = 0x1000, scoped, tag = 'output window, operand 0, single buffered']
    %11 = vsyncpa [#allocation5], 0
    %12 = vsyncpa [#allocation8], 0
    %13 = vsyncpa [#allocation6], 0
    // Predicated region
    $region2: #{tpu_custom_call.1} parent=1 // pred_check
      _
    $region3: #{tpu_custom_call.1} parent=1 // pred_check_branch
      %15 = sbr.rel (0) target = $region5
    $region4: #{tpu_custom_call.1} parent=1 // pred_region
      _
    $region5: #{tpu_custom_call.1} parent=1 // pred_fallthru
      _
    // Predicated region
    $region6: #{tpu_custom_call.1} parent=1 // pred_check
      _
    $region7: #{tpu_custom_call.1} parent=1 // pred_check_branch
      %17 = sbr.rel (0) target = $region9
    $region8: #{tpu_custom_call.1} parent=1 // pred_region
      %19 = vsyncadd [#allocation5], 0
      %s21 = sshll.u32 %s1, 4
      %s22 = int_to_ptr.hbm [resolvable:$true] %s21
      %s23 = sshll.u32 [#allocation4], 4
      %s24 = int_to_ptr.vmem [resolvable:$true] %s23
      %26 = dma.hbm_to_vmem [thread:$0]  %s22, 256, %s24, [#allocation5]
    $region9: #{tpu_custom_call.1} parent=1 // pred_fallthru
      _
    // Predicated region
    $region10: #{tpu_custom_call.1} parent=1 // pred_check
      _
    $region11: #{tpu_custom_call.1} parent=1 // pred_check_branch
      %28 = sbr.rel (0) target = $region13
    $region12: #{tpu_custom_call.1} parent=1 // pred_region
      %30 = vsyncadd [#allocation8], 0
      %s31 = sshll.u32 %s2, 4
      %s32 = int_to_ptr.hbm [resolvable:$true] %s31
      %s33 = sshll.u32 [#allocation7], 4
      %s34 = int_to_ptr.vmem [resolvable:$true] %s33
      %39 = dma.hbm_to_vmem [thread:$0]  %s32, 4096, %s34, [#allocation8], 256, 256, 16
    $region13: #{tpu_custom_call.1} parent=1 // pred_fallthru
      _
    // Predicated region
    $region14: #{tpu_custom_call.1} parent=1 // pred_check
      _
    $region15: #{tpu_custom_call.1} parent=1 // pred_check_branch
      %41 = sbr.rel (0) target = $region17
    $region16: #{tpu_custom_call.1} parent=1 // pred_region
      _
    $region17: #{tpu_custom_call.1} parent=1 // pred_fallthru
      _
    // Predicated region
    $region18: #{tpu_custom_call.1} parent=1 // pred_check
      _
    $region19: #{tpu_custom_call.1} parent=1 // pred_check_branch
      %43 = sbr.rel (0) target = $region21
    $region20: #{tpu_custom_call.1} parent=1 // pred_region
      _
    $region21: #{tpu_custom_call.1} parent=1 // pred_fallthru
      _
    // Predicated region
    $region22: #{tpu_custom_call.1} parent=1 // pred_check
      _
    $region23: #{tpu_custom_call.1} parent=1 // pred_check_branch
      %45 = sbr.rel (0) target = $region25
    $region24: #{tpu_custom_call.1} parent=1 // pred_region
      %47 = dma.done [#allocation5], 256
    $region25: #{tpu_custom_call.1} parent=1 // pred_fallthru
      _
    // Predicated region
    $region26: #{tpu_custom_call.1} parent=1 // pred_check
      _
    $region27: #{tpu_custom_call.1} parent=1 // pred_check_branch
      %49 = sbr.rel (0) target = $region29
    $region28: #{tpu_custom_call.1} parent=1 // pred_region
      %51 = dma.done [#allocation8], 4096
    $region29: #{tpu_custom_call.1} parent=1 // pred_fallthru
      _
    %p52 = scmp.eq.s32.totalorder 0, 0
    // Predicated region
    $region30: #{tpu_custom_call.1} parent=1 // pred_check
      %p53 = pneg %p52
    $region31: #{tpu_custom_call.1} parent=1 // pred_check_branch
      %55 = sbr.rel (%p53) target = $region33
    $region32: #{tpu_custom_call.1} parent=1 // pred_region
      %56 = vst [vmem:[#allocation2] sm:$0xff] 0.0
    $region33: #{tpu_custom_call.1} parent=1 // pred_fallthru
      _
    %v57 = vld [vmem:[#allocation2] sm:$0xff]
    %v58 = vld [vmem:[#allocation4] sm:$0xff]
    %v59 = vld [vmem:[#allocation4 + $0x8] sm:$0xff]
    %v60 = vld [vmem:[#allocation7] sm:$0xff]
    %v61 = vld [vmem:[#allocation7 + $0x8] sm:$0xff]
    %v62 = vld [vmem:[#allocation7 + $0x10] sm:$0xff]
    %v63 = vld [vmem:[#allocation7 + $0x18] sm:$0xff]
    %v64 = vld [vmem:[#allocation7 + $0x20] sm:$0xff]
    %v65 = vld [vmem:[#allocation7 + $0x28] sm:$0xff]
    %v66 = vld [vmem:[#allocation7 + $0x30] sm:$0xff]
    %v67 = vld [vmem:[#allocation7 + $0x38] sm:$0xff]
    %v68 = vld [vmem:[#allocation7 + $0x40] sm:$0xff]
    %v69 = vld [vmem:[#allocation7 + $0x48] sm:$0xff]
    %v70 = vld [vmem:[#allocation7 + $0x50] sm:$0xff]
    %v71 = vld [vmem:[#allocation7 + $0x58] sm:$0xff]
    %v72 = vld [vmem:[#allocation7 + $0x60] sm:$0xff]
    %v73 = vld [vmem:[#allocation7 + $0x68] sm:$0xff]
    %v74 = vld [vmem:[#allocation7 + $0x70] sm:$0xff]
    %v75 = vld [vmem:[#allocation7 + $0x78] sm:$0xff]
    %v76 = vld [vmem:[#allocation7 + $0x80] sm:$0xff]
    %v77 = vld [vmem:[#allocation7 + $0x88] sm:$0xff]
    %v78 = vld [vmem:[#allocation7 + $0x90] sm:$0xff]
    %v79 = vld [vmem:[#allocation7 + $0x98] sm:$0xff]
    %v80 = vld [vmem:[#allocation7 + $0xa0] sm:$0xff]
    %v81 = vld [vmem:[#allocation7 + $0xa8] sm:$0xff]
    %v82 = vld [vmem:[#allocation7 + $0xb0] sm:$0xff]
    %v83 = vld [vmem:[#allocation7 + $0xb8] sm:$0xff]
    %v84 = vld [vmem:[#allocation7 + $0xc0] sm:$0xff]
    %v85 = vld [vmem:[#allocation7 + $0xc8] sm:$0xff]
    %v86 = vld [vmem:[#allocation7 + $0xd0] sm:$0xff]
    %v87 = vld [vmem:[#allocation7 + $0xd8] sm:$0xff]
    %v88 = vld [vmem:[#allocation7 + $0xe0] sm:$0xff]
    %v89 = vld [vmem:[#allocation7 + $0xe8] sm:$0xff]
    %v90 = vld [vmem:[#allocation7 + $0xf0] sm:$0xff]
    %v91 = vld [vmem:[#allocation7 + $0xf8] sm:$0xff]
    %92 = vmatpush.xpose.msra.mxu0 %v90
    %93 = vmatpush.xpose.msra.mxu0 %v88
    %94 = vmatpush.xpose.msra.mxu0 %v86
    %95 = vmatpush.xpose.msra.mxu0 %v84
    %96 = vmatpush.xpose.msra.mxu0 %v82
    %97 = vmatpush.xpose.msra.mxu0 %v80
    %98 = vmatpush.xpose.msra.mxu0 %v78
    %99 = vmatpush.xpose.msra.mxu0 %v76
    %100 = vmatpush.xpose.msra.mxu0 %v74
    %101 = vmatpush.xpose.msra.mxu0 %v72
    %102 = vmatpush.xpose.msra.mxu0 %v70
    %103 = vmatpush.xpose.msra.mxu0 %v68
    %104 = vmatpush.xpose.msra.mxu0 %v66
    %105 = vmatpush.xpose.msra.mxu0 %v64
    %106 = vmatpush.xpose.msra.mxu0 %v62
    %107 = vmatpush.xpose.msra.mxu0 %v60
    %108 = vmatmul.f32.gmra.mxu0 %v58
    %v109 = vpop.f32.mrf.mxu0
    %v110 = vadd.f32 0.0, %v109
    %111 = vdwg.mxu0
    %112 = vmatpush.xpose.msra.mxu0 %v91
    %113 = vmatpush.xpose.msra.mxu0 %v89
    %114 = vmatpush.xpose.msra.mxu0 %v87
    %115 = vmatpush.xpose.msra.mxu0 %v85
    %116 = vmatpush.xpose.msra.mxu0 %v83
    %117 = vmatpush.xpose.msra.mxu0 %v81
    %118 = vmatpush.xpose.msra.mxu0 %v79
    %119 = vmatpush.xpose.msra.mxu0 %v77
    %120 = vmatpush.xpose.msra.mxu0 %v75
    %121 = vmatpush.xpose.msra.mxu0 %v73
    %122 = vmatpush.xpose.msra.mxu0 %v71
    %123 = vmatpush.xpose.msra.mxu0 %v69
    %124 = vmatpush.xpose.msra.mxu0 %v67
    %125 = vmatpush.xpose.msra.mxu0 %v65
    %126 = vmatpush.xpose.msra.mxu0 %v63
    %127 = vmatpush.xpose.msra.mxu0 %v61
    %128 = vmatmul.f32.gmra.mxu0 %v59
    %v129 = vpop.f32.mrf.mxu0
    %v130 = vadd.f32 %v110, %v129
    %131 = vdwg.mxu0
    %v132 = vadd.f32 %v57, %v130
    %133 = vst [vmem:[#allocation2] sm:$0xff] %v132
    // Predicated region
    $region34: #{tpu_custom_call.1} parent=1 // pred_check
      %p134 = pneg %p52
    $region35: #{tpu_custom_call.1} parent=1 // pred_check_branch
      %136 = sbr.rel (%p134) target = $region37
    $region36: #{tpu_custom_call.1} parent=1 // pred_region
      %s137 = sld [smem:[#allocation3]]
      %v138 = vld [vmem:[%s3] sm:$0xff]
      %v139 = vstv %s137
      %v140 = vmul.f32 %v139, %v138
      %v141 = vld [vmem:[#allocation2] sm:$0xff]
      %143 = vset.pattern.permute.xlu0 0
      %144 = vperm.xlu0 %143, %v140
      %v145 = vpop.permute.xlu0 %144
      %v147 = vmul.f32 %v145, %v141
      %v148 = vld [vmem:[%s4] sm:$0x1]
      %v150 = vperm.slane %v148, 0
      %v152 = vmul.f32 %v147, %v150
      %153 = vst [vmem:[#allocation9] sm:$0xff] %v152
    $region37: #{tpu_custom_call.1} parent=1 // pred_fallthru
      _
    // Predicated region
    $region38: #{tpu_custom_call.1} parent=1 // pred_check
      _
    $region39: #{tpu_custom_call.1} parent=1 // pred_check_branch
      %155 = sbr.rel (0) target = $region41
    $region40: #{tpu_custom_call.1} parent=1 // pred_region
      %157 = vsyncadd [#allocation6], 0
      %s159 = sshll.u32 [#allocation9], 4
      %s160 = int_to_ptr.vmem [resolvable:$true] %s159
      %s161 = sshll.u32 %s5, 4
      %s162 = int_to_ptr.hbm [resolvable:$true] %s161
      %164 = dma.vmem_to_hbm [thread:$0]  %s160, 128, %s162, [#allocation6]
    $region41: #{tpu_custom_call.1} parent=1 // pred_fallthru
      _
    // Predicated region
    $region42: #{tpu_custom_call.1} parent=1 // pred_check
      _
    $region43: #{tpu_custom_call.1} parent=1 // pred_check_branch
      %166 = sbr.rel (0) target = $region45
    $region44: #{tpu_custom_call.1} parent=1 // pred_region
      %168 = dma.done [#allocation6], 128
    $region45: #{tpu_custom_call.1} parent=1 // pred_fallthru
      _
    %169 = vsyncpa [#allocation5], 1
    %170 = vsyncpa [#allocation8], 1
    %171 = vsyncpa [#allocation6], 1

</llo_original>
